<compile_context>
chip_gen: v7x
topology: tpu7x:2x2x1
jax: 0.10.0
libtpu: 0.0.40
codegen_flags: <defaults>
</compile_context>

<pallas_src>
import functools

import jax
import jax.numpy as jnp
from jax.experimental import pallas as pl
from jax.experimental.pallas import tpu as pltpu

_LANE = 128
_SUBLANE = 8


def _round_up(v, m):
    return (v + m - 1) // m * m


def _fused_gin_kernel(a_ref, x_ref, w_ref, b_ref, o_ref, acc_ref):
    """One (graph, row-tile, k-tile) block of  relu((A' @ X) @ W + b).

    a_ref   : [TN, TK] bf16  augmented adjacency tile (self-term on diagonal)
    x_ref   : [TK, Dp] bf16  node-feature tile (neighbor axis chunk)
    w_ref   : [Dp, Hp] bf16  linear weight
    b_ref   : [8,  Hp] f32   bias (row 0 valid, sublane-padded)
    o_ref   : [TN, Hp] f32   output rows
    acc_ref : [TN, Dp] f32   VMEM accumulator over the k (neighbor) axis
    """
    k = pl.program_id(2)

    @pl.when(k == 0)
    def _():
        acc_ref[...] = jnp.zeros_like(acc_ref)

    # neighbor (+ self) aggregation: bf16 MXU, f32 accumulation
    acc_ref[...] += jnp.dot(a_ref[...], x_ref[...],
                            preferred_element_type=jnp.float32)

    @pl.when(k == pl.num_programs(2) - 1)
    def _():
        # linear + bias + relu; h@W also on the bf16 MXU path (f32 accumulate)
        h = acc_ref[...].astype(jnp.bfloat16)
        out = jnp.dot(h, w_ref[...], preferred_element_type=jnp.float32)
        o_ref[...] = jnp.maximum(out + b_ref[0:1, :], 0.0)


def pack_intra_gmn(adjs, xs, ws, bs, epss):
    """One-time host-side prep: pad, fold self-term into A, cast to bf16.

    This is deliberately OUTSIDE the jitted hot path -- for repeated forwards
    reuse the returned packed arrays (adjacency / weights are constant).
    """
    max_n = max(x.shape[0] for x in xs)
    d_pad = _round_up(max(x.shape[1] for x in xs), _LANE)
    h_pad = _round_up(max(w.shape[1] for w in ws), _LANE)

    # Row / K tile: whole (padded) graph when small, 256 otherwise
    # (MXU-shaped on v6e/v7x, still fine on v5e).
    if max_n <= 256:
        tile_n = _round_up(max_n, _LANE)
        n_pad = tile_n
        tile_k = n_pad
    else:
        tile_n = 256
        tile_k = 256
        n_pad = _round_up(max_n, tile_n)

    def pad2(m, r, c):
        return jnp.pad(m, ((0, r - m.shape[0]), (0, c - m.shape[1])))

    # A' = A + (1 + eps) I  : self term folded into the diagonal.
    a_list = []
    for a, eps in zip(adjs, epss):
        n = a.shape[0]
        a_aug = a.astype(jnp.float32) + (1.0 + jnp.float32(eps)) * jnp.eye(
            n, dtype=jnp.float32)
        a_list.append(pad2(a_aug, n_pad, n_pad))
    a_all = jnp.stack(a_list).astype(jnp.bfloat16)

    x_all = jnp.stack([pad2(x.astype(jnp.float32), n_pad, d_pad)
                       for x in xs]).astype(jnp.bfloat16)
    w_all = jnp.stack([pad2(w.astype(jnp.float32), d_pad, h_pad)
                       for w in ws]).astype(jnp.bfloat16)
    b_all = jnp.stack([pad2(b.astype(jnp.float32), _SUBLANE, h_pad)
                       for b in bs])

    meta = dict(tile_n=tile_n, tile_k=tile_k,
                n_true=[x.shape[0] for x in xs],
                h_true=[w.shape[1] for w in ws])
    return (a_all, x_all, w_all, b_all), meta


@functools.partial(jax.jit, static_argnames=("tile_n", "tile_k"))
def fused_gin_packed(a_all, x_all, w_all, b_all, *, tile_n, tile_k):
    """Hot path: one fused pallas_call over both graphs on packed arrays."""
    n_graphs, n_pad, _ = a_all.shape
    d_pad = x_all.shape[-1]
    h_pad = w_all.shape[-1]
    n_row_tiles = n_pad // tile_n
    n_k_tiles = n_pad // tile_k

    flops = n_graphs * (2 * n_pad * n_pad * d_pad + 2 * n_pad * d_pad * h_pad)
    bytes_accessed = (a_all.size * 2 + x_all.size * 2 * n_row_tiles
                      + w_all.size * 2 + b_all.size * 4
                      + n_graphs * n_pad * h_pad * 4)

    # VMEM budget: double-buffered input/output blocks + f32 accumulator.
    vmem_est = (2 * (tile_n * tile_k * 2 + tile_k * d_pad * 2
                     + d_pad * h_pad * 2 + _SUBLANE * h_pad * 4
                     + tile_n * h_pad * 4)
                + tile_n * d_pad * 4)
    vmem_limit = int(min(max(2 * vmem_est, 4 << 20), 100 << 20))

    return pl.pallas_call(
        _fused_gin_kernel,
        out_shape=jax.ShapeDtypeStruct((n_graphs, n_pad, h_pad), jnp.float32),
        grid=(n_graphs, n_row_tiles, n_k_tiles),
        in_specs=[
            pl.BlockSpec((None, tile_n, tile_k), lambda g, i, k: (g, i, k)),  # A'
            pl.BlockSpec((None, tile_k, d_pad), lambda g, i, k: (g, k, 0)),   # X
            pl.BlockSpec((None, d_pad, h_pad), lambda g, i, k: (g, 0, 0)),    # W
            pl.BlockSpec((None, _SUBLANE, h_pad), lambda g, i, k: (g, 0, 0)), # b
        ],
        out_specs=pl.BlockSpec((None, tile_n, h_pad), lambda g, i, k: (g, i, 0)),
        scratch_shapes=[pltpu.VMEM((tile_n, d_pad), jnp.float32)],
        compiler_params=pltpu.CompilerParams(
            dimension_semantics=("parallel", "parallel", "arbitrary"),
            vmem_limit_bytes=vmem_limit),
        cost_estimate=pl.CostEstimate(flops=flops, transcendentals=0,
                                      bytes_accessed=bytes_accessed),
    )(a_all, x_all, w_all, b_all)


def our_gmn_custom_intra_forward(data_q, data_t, params_q, params_t):
    """forward(pyg_data_q, pyg_data_t) -> (pyg_data_q', pyg_data_t').

    Each pyg_data is represented as (x, adj); the GNN replaces x with the new
    node embeddings (adjacency unchanged), mirroring gnn_q(pyg_data_q) /
    gnn_t(pyg_data_t).  Both graphs go through one fused Pallas launch.
    """
    x_q, adj_q = data_q
    x_t, adj_t = data_t

    packed, meta = pack_intra_gmn(
        [adj_q, adj_t],
        [x_q, x_t],
        [params_q["w"], params_t["w"]],
        [params_q["b"], params_t["b"]],
        [params_q["eps"], params_t["eps"]],
    )
    out = fused_gin_packed(*packed, tile_n=meta["tile_n"],
                           tile_k=meta["tile_k"])
    x_q_new = out[0, :meta["n_true"][0], :meta["h_true"][0]]
    x_t_new = out[1, :meta["n_true"][1], :meta["h_true"][1]]
    return (x_q_new, adj_q), (x_t_new, adj_t)


def _reference_gin(adj, x, w, b, eps):
    # mirrors the kernel numerics: bf16 A'@X and bf16 h@W, f32 accumulation
    n = adj.shape[0]
    a_aug = (adj.astype(jnp.float32)
             + (1.0 + jnp.float32(eps)) * jnp.eye(n, dtype=jnp.float32))
    agg = jnp.dot(a_aug.astype(jnp.bfloat16), x.astype(jnp.bfloat16),
                  preferred_element_type=jnp.float32)
    out = jnp.dot(agg.astype(jnp.bfloat16), w.astype(jnp.bfloat16),
                  preferred_element_type=jnp.float32)
    return jnp.maximum(out + b, 0.0)


if __name__ == "__main__":
    key = jax.random.PRNGKey(0)
    k_xq, k_xt, k_aq, k_at, k_wq, k_wt, k_bq, k_bt = jax.random.split(key, 8)

    # small shapes: query graph 32 nodes, target graph 48 nodes, D=16 -> H=32
    NQ, NT, D, H = 32, 48, 16, 32

    x_q = jax.random.normal(k_xq, (NQ, D), dtype=jnp.float32)
    x_t = jax.random.normal(k_xt, (NT, D), dtype=jnp.float32)

    # symmetric 0/1 adjacency without self loops (dense)
    def make_adj(k, n):
        a = (jax.random.uniform(k, (n, n)) < 0.2).astype(jnp.float32)
        a = jnp.maximum(a, a.T)
        return a * (1.0 - jnp.eye(n, dtype=jnp.float32))

    adj_q = make_adj(k_aq, NQ)
    adj_t = make_adj(k_at, NT)

    # deterministic synthetic GNN parameters (separate for gnn_q / gnn_t)
    params_q = {
        "w": jax.random.normal(k_wq, (D, H), dtype=jnp.float32) * 0.1,
        "b": jax.random.normal(k_bq, (1, H), dtype=jnp.float32) * 0.01,
        "eps": 0.0,
    }
    params_t = {
        "w": jax.random.normal(k_wt, (D, H), dtype=jnp.float32) * 0.1,
        "b": jax.random.normal(k_bt, (1, H), dtype=jnp.float32) * 0.01,
        "eps": 0.0,
    }

    # --- hoisted one-time prep (constant across forwards) ------------------
    packed, meta = pack_intra_gmn(
        [adj_q, adj_t], [x_q, x_t],
        [params_q["w"], params_t["w"]],
        [params_q["b"], params_t["b"]],
        [params_q["eps"], params_t["eps"]])
    for p in packed:
        jax.block_until_ready(p)

    # --- hot path: jitted pallas_call only ---------------------------------
    out = fused_gin_packed(*packed, tile_n=meta["tile_n"],
                           tile_k=meta["tile_k"])
    jax.block_until_ready(out)

    out_q = out[0, :NQ, :H]
    out_t = out[1, :NT, :H]

    # also exercise the full module-shaped wrapper once
    (out_q2, _), (out_t2, _) = our_gmn_custom_intra_forward(
        (x_q, adj_q), (x_t, adj_t), params_q, params_t)
    jax.block_until_ready(out_q2)
    jax.block_until_ready(out_t2)

    # correctness check against pure-JAX reference (same precision recipe)
    ref_q = _reference_gin(adj_q, x_q, params_q["w"], params_q["b"],
                           params_q["eps"])
    ref_t = _reference_gin(adj_t, x_t, params_t["w"], params_t["b"],
                           params_t["eps"])
    assert out_q.shape == (NQ, H) and out_t.shape == (NT, H)
    assert jnp.allclose(out_q, ref_q, atol=2e-3, rtol=2e-3)
    assert jnp.allclose(out_t, ref_t, atol=2e-3, rtol=2e-3)
    assert jnp.allclose(out_q2, ref_q, atol=2e-3, rtol=2e-3)
    assert jnp.allclose(out_t2, ref_t, atol=2e-3, rtol=2e-3)

    print("KERNEL_OK")
</pallas_src>

<mosaic_0001>
module attributes {stable_mosaic.version = 11 : i64} {
  func.func @_fused_gin_kernel(%arg0: i32, %arg1: i32, %arg2: i32, %arg3: memref<1x128x128xbf16, #tpu.memory_space<vmem>>, %arg4: memref<1x128x128xbf16, #tpu.memory_space<vmem>>, %arg5: memref<1x128x128xbf16, #tpu.memory_space<vmem>>, %arg6: memref<1x8x128xf32, #tpu.memory_space<vmem>>, %arg7: memref<1x128x128xf32, #tpu.memory_space<vmem>>, %arg8: memref<128x128xf32, #tpu.memory_space<vmem>>) attributes {dimension_semantics = [#tpu.dimension_semantics<parallel>, #tpu.dimension_semantics<parallel>, #tpu.dimension_semantics<arbitrary>], iteration_bounds = array<i64: 2, 1, 1>, scalar_prefetch = 0 : i64, scratch_operands = 1 : i64, tpu.core_type = #tpu.core_type<tc>, window_params = [{transform_indices = @transform_0, window_bounds = array<i64: 1, 128, 128>}, {transform_indices = @transform_1, window_bounds = array<i64: 1, 128, 128>}, {transform_indices = @transform_2, window_bounds = array<i64: 1, 128, 128>}, {transform_indices = @transform_3, window_bounds = array<i64: 1, 8, 128>}, {transform_indices = @transform_4, window_bounds = array<i64: 1, 128, 128>}]} {
    %c0_i32 = arith.constant 0 : i32
    %0 = arith.cmpi eq, %arg2, %c0_i32 : i32
    %1 = arith.extui %0 : i1 to i32
    %c0_i32_0 = arith.constant 0 : i32
    %2 = arith.cmpi ne, %1, %c0_i32_0 : i32
    scf.if %2 {
      %cst_12 = arith.constant 0.000000e+00 : f32
      %14 = vector.broadcast %cst_12 : f32 to vector<128x128xf32>
      %c0_13 = arith.constant 0 : index
      %c0_14 = arith.constant 0 : index
      %15 = vector.load %arg8[%c0_13, %c0_14] : memref<128x128xf32, #tpu.memory_space<vmem>>, vector<128x128xf32>
      tpu.vector_store %arg8[%c0_13, %c0_14], %14 {strides = array<i32>} : memref<128x128xf32, #tpu.memory_space<vmem>>, vector<128x128xf32>,
    } else {
    }
    %c0 = arith.constant 0 : index
    %c0_1 = arith.constant 0 : index
    %3 = vector.load %arg8[%c0, %c0_1] : memref<128x128xf32, #tpu.memory_space<vmem>>, vector<128x128xf32>
    %c0_2 = arith.constant 0 : index
    %c0_3 = arith.constant 0 : index
    %c0_4 = arith.constant 0 : index
    %4 = vector.load %arg3[%c0_2, %c0_3, %c0_4] : memref<1x128x128xbf16, #tpu.memory_space<vmem>>, vector<1x128x128xbf16>
    %5 = vector.shape_cast %4 : vector<1x128x128xbf16> to vector<128x128xbf16>
    %c0_5 = arith.constant 0 : index
    %c0_6 = arith.constant 0 : index
    %c0_7 = arith.constant 0 : index
    %6 = vector.load %arg4[%c0_5, %c0_6, %c0_7] : memref<1x128x128xbf16, #tpu.memory_space<vmem>>, vector<1x128x128xbf16>
    %7 = vector.shape_cast %6 : vector<1x128x128xbf16> to vector<128x128xbf16>
    %cst = arith.constant dense<0.000000e+00> : vector<128x128xf32>
    %8 = tpu.matmul %5, %7, %cst {dimension_numbers = #tpu.dot_dimension_numbers<[1], [0], [0], [1], [0, 0, 1, 1], [], []>} : vector<128x128xbf16>, vector<128x128xbf16>, vector<128x128xf32> -> vector<128x128xf32>
    %9 = arith.addf %3, %8 : vector<128x128xf32>
    %c0_8 = arith.constant 0 : index
    %c0_9 = arith.constant 0 : index
    %10 = vector.load %arg8[%c0_8, %c0_9] : memref<128x128xf32, #tpu.memory_space<vmem>>, vector<128x128xf32>
    tpu.vector_store %arg8[%c0_8, %c0_9], %9 {strides = array<i32>} : memref<128x128xf32, #tpu.memory_space<vmem>>, vector<128x128xf32>,
    %c0_i32_10 = arith.constant 0 : i32
    %11 = arith.cmpi eq, %arg2, %c0_i32_10 : i32
    %12 = arith.extui %11 : i1 to i32
    %c0_i32_11 = arith.constant 0 : i32
    %13 = arith.cmpi ne, %12, %c0_i32_11 : i32
    scf.if %13 {
      %c0_12 = arith.constant 0 : index
      %c0_13 = arith.constant 0 : index
      %14 = vector.load %arg8[%c0_12, %c0_13] : memref<128x128xf32, #tpu.memory_space<vmem>>, vector<128x128xf32>
      %15 = arith.truncf %14 : vector<128x128xf32> to vector<128x128xbf16>
      %c0_14 = arith.constant 0 : index
      %c0_15 = arith.constant 0 : index
      %c0_16 = arith.constant 0 : index
      %16 = vector.load %arg5[%c0_14, %c0_15, %c0_16] : memref<1x128x128xbf16, #tpu.memory_space<vmem>>, vector<1x128x128xbf16>
      %17 = vector.shape_cast %16 : vector<1x128x128xbf16> to vector<128x128xbf16>
      %cst_17 = arith.constant dense<0.000000e+00> : vector<128x128xf32>
      %18 = tpu.matmul %15, %17, %cst_17 {dimension_numbers = #tpu.dot_dimension_numbers<[1], [0], [0], [1], [0, 0, 1, 1], [], []>} : vector<128x128xbf16>, vector<128x128xbf16>, vector<128x128xf32> -> vector<128x128xf32>
      %c0_18 = arith.constant 0 : index
      %c0_19 = arith.constant 0 : index
      %c0_20 = arith.constant 0 : index
      %19 = vector.load %arg6[%c0_18, %c0_19, %c0_20] : memref<1x8x128xf32, #tpu.memory_space<vmem>>, vector<1x1x128xf32>
      %20 = vector.shape_cast %19 : vector<1x1x128xf32> to vector<1x128xf32>
      %21 = vector.broadcast %20 : vector<1x128xf32> to vector<128x128xf32>
      %22 = arith.addf %18, %21 : vector<128x128xf32>
      %cst_21 = arith.constant 0.000000e+00 : f32
      %23 = vector.broadcast %cst_21 : f32 to vector<128x128xf32>
      %24 = arith.maximumf %22, %23 : vector<128x128xf32>
      %c0_22 = arith.constant 0 : index
      %c0_23 = arith.constant 0 : index
      %c0_24 = arith.constant 0 : index
      %25 = vector.load %arg7[%c0_22, %c0_23, %c0_24] : memref<1x128x128xf32, #tpu.memory_space<vmem>>, vector<1x128x128xf32>
      %26 = vector.shape_cast %25 : vector<1x128x128xf32> to vector<128x128xf32>
      %27 = vector.shape_cast %24 : vector<128x128xf32> to vector<1x128x128xf32>
      tpu.vector_store %arg7[%c0_22, %c0_23, %c0_24], %27 {strides = array<i32>} : memref<1x128x128xf32, #tpu.memory_space<vmem>>, vector<1x128x128xf32>,
    } else {
    }
    return
  }
  func.func @transform_0(%arg0: i32, %arg1: i32, %arg2: i32) -> (i32, i32, i32) {
    %c0_i32 = arith.constant 0 : i32
    return %arg0, %arg1, %arg2 : i32, i32, i32
  }
  func.func @transform_1(%arg0: i32, %arg1: i32, %arg2: i32) -> (i32, i32, i32) {
    %c0_i32 = arith.constant 0 : i32
    %c0_i32_0 = arith.constant 0 : i32
    return %arg0, %arg2, %c0_i32 : i32, i32, i32
  }
  func.func @transform_2(%arg0: i32, %arg1: i32, %arg2: i32) -> (i32, i32, i32) {
    %c0_i32 = arith.constant 0 : i32
    %c0_i32_0 = arith.constant 0 : i32
    %c0_i32_1 = arith.constant 0 : i32
    return %arg0, %c0_i32, %c0_i32_0 : i32, i32, i32
  }
  func.func @transform_3(%arg0: i32, %arg1: i32, %arg2: i32) -> (i32, i32, i32) {
    %c0_i32 = arith.constant 0 : i32
    %c0_i32_0 = arith.constant 0 : i32
    %c0_i32_1 = arith.constant 0 : i32
    return %arg0, %c0_i32, %c0_i32_0 : i32, i32, i32
  }
  func.func @transform_4(%arg0: i32, %arg1: i32, %arg2: i32) -> (i32, i32, i32) {
    %c0_i32 = arith.constant 0 : i32
    %c0_i32_0 = arith.constant 0 : i32
    return %arg0, %arg1, %c0_i32 : i32, i32, i32
  }
}

</mosaic_0001>

<llo_original>
// kernel: fused_gin_packed.1
$region0: #{fused_gin_packed.1}
  #allocation0 [shape = 'u32[]', space=smem, size = 0x4, offset = 0x4, fixed_abs, tag = 'smem constant byte address 0x4 - core index']
  #allocation1 [shape = 'u32[144,128]{1,0:T(1,128)}', space=vmem, size = 0x12000, scoped, tag = 'internal scratch']
  #allocation2 [shape = 'f32[128,128]{1,0:T(8,128)}', space=vmem, size = 0x10000, scoped, tag = 'scratch operand']
  %s0 = inlined_call_operand.hbm [shape: bf16[2,128,128], index: 0, kind: input, shape index: {}]
  %s1 = inlined_call_operand.hbm [shape: bf16[2,128,128], index: 1, kind: input, shape index: {}]
  %s2 = inlined_call_operand.hbm [shape: bf16[2,128,128], index: 2, kind: input, shape index: {}]
  %s3 = inlined_call_operand.hbm [shape: f32[2,8,128], index: 3, kind: input, shape index: {}]
  %s4 = inlined_call_operand.hbm [shape: f32[2,128,128], index: 4, kind: output, shape index: {}]
  %s5 = sld [smem:[#allocation0]]
  $region73: #{fused_gin_packed.1} parent=0
    _
  %s7 = ssub.s32 1, %s5
  %s8 = scalar_select 0, %s7, %s5
  $region1: #{fused_gin_packed.1} parent=0
    #allocation3 [shape = 'u8[65536]{0}', space=vmem, size = 0x10000, scoped, tag = 'input window, operand 0']
    #allocation4 [shape = 's32[2]{0}', space=sflag, size = 0x8, scoped, tag = 'scoped memory for fused_gin_packed.1']
    #allocation5 [shape = 's32[2]{0}', space=sflag, size = 0x8, scoped, tag = 'scoped memory for fused_gin_packed.1']
    #allocation6 [shape = 'u8[65536]{0}', space=vmem, size = 0x10000, scoped, tag = 'input window, operand 1']
    #allocation7 [shape = 's32[2]{0}', space=sflag, size = 0x8, scoped, tag = 'scoped memory for fused_gin_packed.1']
    #allocation8 [shape = 'u8[65536]{0}', space=vmem, size = 0x10000, scoped, tag = 'input window, operand 2']
    #allocation9 [shape = 'u8[8192]{0}', space=vmem, size = 0x2000, scoped, tag = 'input window, operand 3']
    #allocation10 [shape = 's32[2]{0}', space=sflag, size = 0x8, scoped, tag = 'scoped memory for fused_gin_packed.1']
    #allocation11 [shape = 'u8[131072]{0}', space=vmem, size = 0x20000, scoped, tag = 'output window, operand 0']
    %9 = vsyncpa [#allocation4], 0
    %s10 = scalar_lea.sflag [#allocation4], 1
    %11 = vsyncpa %s10, 0
    %12 = vsyncpa [#allocation7], 0
    %s13 = scalar_lea.sflag [#allocation7], 1
    %14 = vsyncpa %s13, 0
    %15 = vsyncpa [#allocation10], 0
    %s16 = scalar_lea.sflag [#allocation10], 1
    %17 = vsyncpa %s16, 0
    %18 = vsyncpa [#allocation5], 0
    %s19 = scalar_lea.sflag [#allocation5], 1
    %20 = vsyncpa %s19, 0
    loop: start=0, step=1, limit=4
    $region2: #{fused_gin_packed.1} parent=1 // loop_pre_header
      _
    $region3: #{fused_gin_packed.1} parent=1 // loop_header
      %s22 = sphi 0, %s26
      %p23 = scmp.ge.s32.totalorder %s22, 4
      %s29 = sphi 0, %s48
      %s30 = sphi 0, %s44
      %s31 = sphi 0, %s40
      %s32 = sphi 0, %s29
      %s33 = sphi 0, %s30
      %s34 = sphi 0, %s31
      %s35 = sphi 0, %s32
      %s36 = sphi 0, %s33
      %s37 = sphi 0, %s34
      %s55 = sphi 0, %s57
      %s58 = sphi 0, %s55
      %s59 = sphi 0, %s58
      %s75 = sphi 0, %s59
      %s83 = sphi 0, %s85
      %s86 = sphi 0, %s83
      %s87 = sphi 0, %s86
      %s103 = sphi 0, %s87
      %s109 = sphi 0, %s111
      %s112 = sphi 0, %s109
      %s113 = sphi 0, %s112
      %s129 = sphi 0, %s113
      %s135 = sphi 0, %s137
      %s138 = sphi 0, %s135
      %s139 = sphi 0, %s138
      %s155 = sphi 0, %s139
      %s163 = sphi 0, %s165
      %s166 = sphi 0, %s163
      %s167 = sphi 0, %s166
      %s183 = sphi 0, %s167
    $region4: #{fused_gin_packed.1} parent=1 // loop_header_branch
      %25 = sbr.rel (%p23) target = $region8
    $region5: #{fused_gin_packed.1} parent=1 // loop_body
      %s27 = ssub.s32 %s22, 1
      %s28 = ssub.s32 %s22, 2
      %s38 = sadd.s32 1, %s31
      %p39 = scmp.ge.s32.totalorder %s38, 1
      %s40 = scalar_select %p39, 0, %s38
      %s41 = sadd.s32 1, %s30
      %s42 = scalar_select %p39, %s41, %s30
      %p43 = scmp.ge.s32.totalorder %s42, 1
      %s44 = scalar_select %p43, 0, %s42
      %s45 = sadd.s32 1, %s29
      %s46 = scalar_select %p43, %s45, %s29
      %p47 = scmp.ge.s32.totalorder %s46, 2
      %s48 = scalar_select %p47, 0, %s46
      %s49 = ssub.s32 %s29, %s48
      %s50 = ssub.s32 %s30, %s44
      %s51 = sor.u32 %s49, %s50
      %s52 = ssub.s32 %s31, %s40
      %s53 = sor.u32 %s51, %s52
      %p54 = scmp.eq.s32.totalorder %s53, 0
      %s56 = sadd.s32 %s55, 1
      %s57 = scalar_select %p54, %s55, %s56
      %p60 = pneg %p54
      %p61 = scmp.eq.s32.totalorder %s22, 1
      %p62 = por %p60, %p61
      %p63 = scmp.ne.s32.totalorder %s55, %s58
      %p64 = scmp.eq.s32.totalorder %s22, 0
      %p65 = por %p63, %p64
      %p66 = scmp.ne.s32.totalorder %s55, %s58
      %p67 = scmp.eq.s32.totalorder %s27, 1
      %p68 = por %p66, %p67
      %p69 = scmp.ne.s32.totalorder %s58, %s59
      %p70 = scmp.eq.s32.totalorder %s27, 0
      %p71 = por %p69, %p70
      %p72 = scmp.ne.s32.totalorder %s58, %s59
      %p73 = scmp.eq.s32.totalorder %s28, 1
      %p74 = por %p72, %p73
      %p76 = scmp.ne.s32.totalorder %s59, %s75
      %p77 = scmp.eq.s32.totalorder %s28, 0
      %p78 = por %p76, %p77
      %s79 = ssub.s32 %s29, %s48
      %s80 = ssub.s32 %s31, %s40
      %s81 = sor.u32 %s79, %s80
      %p82 = scmp.eq.s32.totalorder %s81, 0
      %s84 = sadd.s32 %s83, 1
      %s85 = scalar_select %p82, %s83, %s84
      %p88 = pneg %p82
      %p89 = scmp.eq.s32.totalorder %s22, 1
      %p90 = por %p88, %p89
      %p91 = scmp.ne.s32.totalorder %s83, %s86
      %p92 = scmp.eq.s32.totalorder %s22, 0
      %p93 = por %p91, %p92
      %p94 = scmp.ne.s32.totalorder %s83, %s86
      %p95 = scmp.eq.s32.totalorder %s27, 1
      %p96 = por %p94, %p95
      %p97 = scmp.ne.s32.totalorder %s86, %s87
      %p98 = scmp.eq.s32.totalorder %s27, 0
      %p99 = por %p97, %p98
      %p100 = scmp.ne.s32.totalorder %s86, %s87
      %p101 = scmp.eq.s32.totalorder %s28, 1
      %p102 = por %p100, %p101
      %p104 = scmp.ne.s32.totalorder %s87, %s103
      %p105 = scmp.eq.s32.totalorder %s28, 0
      %p106 = por %p104, %p105
      %s107 = ssub.s32 %s29, %s48
      %p108 = scmp.eq.s32.totalorder %s107, 0
      %s110 = sadd.s32 %s109, 1
      %s111 = scalar_select %p108, %s109, %s110
      %p114 = pneg %p108
      %p115 = scmp.eq.s32.totalorder %s22, 1
      %p116 = por %p114, %p115
      %p117 = scmp.ne.s32.totalorder %s109, %s112
      %p118 = scmp.eq.s32.totalorder %s22, 0
      %p119 = por %p117, %p118
      %p120 = scmp.ne.s32.totalorder %s109, %s112
      %p121 = scmp.eq.s32.totalorder %s27, 1
      %p122 = por %p120, %p121
      %p123 = scmp.ne.s32.totalorder %s112, %s113
      %p124 = scmp.eq.s32.totalorder %s27, 0
      %p125 = por %p123, %p124
      %p126 = scmp.ne.s32.totalorder %s112, %s113
      %p127 = scmp.eq.s32.totalorder %s28, 1
      %p128 = por %p126, %p127
      %p130 = scmp.ne.s32.totalorder %s113, %s129
      %p131 = scmp.eq.s32.totalorder %s28, 0
      %p132 = por %p130, %p131
      %s133 = ssub.s32 %s29, %s48
      %p134 = scmp.eq.s32.totalorder %s133, 0
      %s136 = sadd.s32 %s135, 1
      %s137 = scalar_select %p134, %s135, %s136
      %p140 = pneg %p134
      %p141 = scmp.eq.s32.totalorder %s22, 1
      %p142 = por %p140, %p141
      %p143 = scmp.ne.s32.totalorder %s135, %s138
      %p144 = scmp.eq.s32.totalorder %s22, 0
      %p145 = por %p143, %p144
      %p146 = scmp.ne.s32.totalorder %s135, %s138
      %p147 = scmp.eq.s32.totalorder %s27, 1
      %p148 = por %p146, %p147
      %p149 = scmp.ne.s32.totalorder %s138, %s139
      %p150 = scmp.eq.s32.totalorder %s27, 0
      %p151 = por %p149, %p150
      %p152 = scmp.ne.s32.totalorder %s138, %s139
      %p153 = scmp.eq.s32.totalorder %s28, 1
      %p154 = por %p152, %p153
      %p156 = scmp.ne.s32.totalorder %s139, %s155
      %p157 = scmp.eq.s32.totalorder %s28, 0
      %p158 = por %p156, %p157
      %s159 = ssub.s32 %s29, %s48
      %s160 = ssub.s32 %s30, %s44
      %s161 = sor.u32 %s159, %s160
      %p162 = scmp.eq.s32.totalorder %s161, 0
      %s164 = sadd.s32 %s163, 1
      %s165 = scalar_select %p162, %s163, %s164
      %p168 = pneg %p162
      %p169 = scmp.eq.s32.totalorder %s22, 1
      %p170 = por %p168, %p169
      %p171 = scmp.ne.s32.totalorder %s163, %s166
      %p172 = scmp.eq.s32.totalorder %s22, 0
      %p173 = por %p171, %p172
      %p174 = scmp.ne.s32.totalorder %s163, %s166
      %p175 = scmp.eq.s32.totalorder %s27, 1
      %p176 = por %p174, %p175
      %p177 = scmp.ne.s32.totalorder %s166, %s167
      %p178 = scmp.eq.s32.totalorder %s27, 0
      %p179 = por %p177, %p178
      %p180 = scmp.ne.s32.totalorder %s166, %s167
      %p181 = scmp.eq.s32.totalorder %s28, 1
      %p182 = por %p180, %p181
      %p184 = scmp.ne.s32.totalorder %s167, %s183
      %p185 = scmp.eq.s32.totalorder %s28, 0
      %p186 = por %p184, %p185
      %p187 = scmp.le.s32.totalorder 1, %s22
      %p188 = scmp.lt.s32.totalorder %s22, 3
      %p189 = pnand %p187, %p188
      %p190 = pneg %p189
      // Predicated region
      $region9: #{fused_gin_packed.1} parent=5 // pred_check
        _
      $region10: #{fused_gin_packed.1} parent=5 // pred_check_branch
        %192 = sbr.rel (%p189) target = $region12
      $region11: #{fused_gin_packed.1} parent=5 // pred_region
        %s193 = ssub.s32 %s22, 1
      $region12: #{fused_gin_packed.1} parent=5 // pred_fallthru
        _
      %p194 = scmp.lt.s32.totalorder %s22, 2
      // Predicated region
      $region13: #{fused_gin_packed.1} parent=5 // pred_check
        %p195 = pneg %p194
      $region14: #{fused_gin_packed.1} parent=5 // pred_check_branch
        %197 = sbr.rel (%p195) target = $region16
      $region15: #{fused_gin_packed.1} parent=5 // pred_region
        // Predicated region
        $region17: #{fused_gin_packed.1} parent=15 // pred_check
          %p198 = pneg %p65
        $region18: #{fused_gin_packed.1} parent=15 // pred_check_branch
          %200 = sbr.rel (%p198) target = $region20
        $region19: #{fused_gin_packed.1} parent=15 // pred_region
          %s201 = sand.u32 %s55, 1
          %s202 = scalar_lea.sflag [#allocation4], %s201
          %s203 = sand.u32 %s55, 1
          %s204 = smul.addr %s203, 64
          %s205 = scalar_lea.vmem [#allocation3], %s204
          %s206 = smul.u32 16, %s30
          %s208 = ssub.s32 1024, 1024
          %209 = vsyncadd %s202, %s208
          %s210 = sadd.s32 %s31, %s206
          %s211 = smul.addr %s29, 16
          %s212 = sadd.s32 %s210, %s211
          %s213 = smul.addr %s212, 64
          %s214 = scalar_lea.hbm %s0, %s213
          %s215 = sshll.u32 %s205, 4
          %s216 = int_to_ptr.vmem [resolvable:$true] %s215
          %221 = dma.hbm_to_vmem [thread:$0]  %s214, 1024, %s216, %s202, 64, 64, 4
        $region20: #{fused_gin_packed.1} parent=15 // pred_fallthru
          _
        // Predicated region
        $region21: #{fused_gin_packed.1} parent=15 // pred_check
          %p222 = pneg %p93
        $region22: #{fused_gin_packed.1} parent=15 // pred_check_branch
          %224 = sbr.rel (%p222) target = $region24
        $region23: #{fused_gin_packed.1} parent=15 // pred_region
          %s225 = sand.u32 %s22, 1
          %s226 = scalar_lea.sflag [#allocation7], %s225
          %s227 = sand.u32 %s83, 1
          %s228 = smul.addr %s227, 64
          %s229 = scalar_lea.vmem [#allocation6], %s228
          %s230 = smul.u32 16, %s31
          %s232 = ssub.s32 1024, 1024
          %233 = vsyncadd %s226, %s232
          %s234 = smul.addr %s29, 16
          %s235 = sadd.s32 %s230, %s234
          %s236 = smul.addr %s235, 64
          %s237 = scalar_lea.hbm %s1, %s236
          %s238 = sshll.u32 %s229, 4
          %s239 = int_to_ptr.vmem [resolvable:$true] %s238
          %244 = dma.hbm_to_vmem [thread:$0]  %s237, 1024, %s239, %s226, 64, 64, 4
        $region24: #{fused_gin_packed.1} parent=15 // pred_fallthru
          _
        // Predicated region
        $region25: #{fused_gin_packed.1} parent=15 // pred_check
          %p245 = pneg %p119
        $region26: #{fused_gin_packed.1} parent=15 // pred_check_branch
          %247 = sbr.rel (%p245) target = $region28
        $region27: #{fused_gin_packed.1} parent=15 // pred_region
          %s248 = sand.u32 %s22, 1
          %s249 = scalar_lea.sflag [#allocation7], %s248
          %s250 = sand.u32 %s109, 1
          %s251 = smul.addr %s250, 64
          %s252 = scalar_lea.vmem [#allocation8], %s251
          %s254 = ssub.s32 1024, 1024
          %255 = vsyncadd %s249, %s254
          %s256 = smul.addr %s29, 16
          %s257 = smul.addr %s256, 64
          %s258 = scalar_lea.hbm %s2, %s257
          %s259 = sshll.u32 %s252, 4
          %s260 = int_to_ptr.vmem [resolvable:$true] %s259
          %265 = dma.hbm_to_vmem [thread:$0]  %s258, 1024, %s260, %s249, 64, 64, 4
        $region28: #{fused_gin_packed.1} parent=15 // pred_fallthru
          _
        // Predicated region
        $region29: #{fused_gin_packed.1} parent=15 // pred_check
          %p266 = pneg %p145
        $region30: #{fused_gin_packed.1} parent=15 // pred_check_branch
          %268 = sbr.rel (%p266) target = $region32
        $region31: #{fused_gin_packed.1} parent=15 // pred_region
          %s269 = sand.u32 %s135, 1
          %s270 = scalar_lea.sflag [#allocation10], %s269
          %s271 = sand.u32 %s135, 1
          %s272 = smul.addr %s271, 8
          %s273 = scalar_lea.vmem [#allocation9], %s272
          %s275 = ssub.s32 128, 128
          %276 = vsyncadd %s270, %s275
          %s277 = smul.addr %s29, 128
          %s278 = scalar_lea.hbm %s3, %s277
          %s280 = sshll.u32 %s273, 4
          %s281 = int_to_ptr.vmem [resolvable:$true] %s280
          %283 = dma.hbm_to_vmem [thread:$0]  %s278, 128, %s281, %s270
        $region32: #{fused_gin_packed.1} parent=15 // pred_fallthru
          _
      $region16: #{fused_gin_packed.1} parent=5 // pred_fallthru
        _
      %p284 = scmp.le.s32.totalorder 1, %s22
      %p285 = scmp.lt.s32.totalorder %s22, 3
      %p286 = pnand %p284, %p285
      %p287 = pneg %p286
      // Predicated region
      $region33: #{fused_gin_packed.1} parent=5 // pred_check
        _
      $region34: #{fused_gin_packed.1} parent=5 // pred_check_branch
        %289 = sbr.rel (%p286) target = $region36
      $region35: #{fused_gin_packed.1} parent=5 // pred_region
        %s290 = ssub.s32 %s22, 1
        %s291 = sand.u32 %s58, 1
        %s292 = scalar_lea.sflag [#allocation4], %s291
        %s293 = sand.u32 %s58, 1
        %s294 = smul.addr %s293, 64
        %s295 = scalar_lea.vmem [#allocation3], %s294
        // Predicated region
        $region37: #{fused_gin_packed.1} parent=35 // pred_check
          %p296 = pneg %p71
        $region38: #{fused_gin_packed.1} parent=35 // pred_check_branch
          %298 = sbr.rel (%p296) target = $region40
        $region39: #{fused_gin_packed.1} parent=35 // pred_region
          %299 = dma.done %s292, 1024
        $region40: #{fused_gin_packed.1} parent=35 // pred_fallthru
          _
        %s300 = sand.u32 %s27, 1
        %s301 = scalar_lea.sflag [#allocation7], %s300
        %s302 = sand.u32 %s86, 1
        %s303 = smul.addr %s302, 64
        %s304 = scalar_lea.vmem [#allocation6], %s303
        // Predicated region
        $region41: #{fused_gin_packed.1} parent=35 // pred_check
          %p305 = pneg %p99
        $region42: #{fused_gin_packed.1} parent=35 // pred_check_branch
          %307 = sbr.rel (%p305) target = $region44
        $region43: #{fused_gin_packed.1} parent=35 // pred_region
          %308 = dma.done %s301, 1024
        $region44: #{fused_gin_packed.1} parent=35 // pred_fallthru
          _
        %s309 = sand.u32 %s27, 1
        %s310 = scalar_lea.sflag [#allocation7], %s309
        %s311 = sand.u32 %s112, 1
        %s312 = smul.addr %s311, 64
        %s313 = scalar_lea.vmem [#allocation8], %s312
        // Predicated region
        $region45: #{fused_gin_packed.1} parent=35 // pred_check
          %p314 = pneg %p125
        $region46: #{fused_gin_packed.1} parent=35 // pred_check_branch
          %316 = sbr.rel (%p314) target = $region48
        $region47: #{fused_gin_packed.1} parent=35 // pred_region
          %317 = dma.done %s310, 1024
        $region48: #{fused_gin_packed.1} parent=35 // pred_fallthru
          _
        %s318 = sand.u32 %s138, 1
        %s319 = scalar_lea.sflag [#allocation10], %s318
        %s320 = sand.u32 %s138, 1
        %s321 = smul.addr %s320, 8
        %s322 = scalar_lea.vmem [#allocation9], %s321
        // Predicated region
        $region49: #{fused_gin_packed.1} parent=35 // pred_check
          %p323 = pneg %p151
        $region50: #{fused_gin_packed.1} parent=35 // pred_check_branch
          %325 = sbr.rel (%p323) target = $region52
        $region51: #{fused_gin_packed.1} parent=35 // pred_region
          %326 = dma.done %s319, 128
        $region52: #{fused_gin_packed.1} parent=35 // pred_fallthru
          _
        %s327 = sand.u32 %s58, 1
        %s328 = scalar_lea.sflag [#allocation4], %s327
        %s329 = sand.u32 %s58, 1
        %s330 = smul.addr %s329, 64
        %s331 = scalar_lea.vmem [#allocation3], %s330
        %p332 = pneg %p71
        %p333 = pneg %p68
        %s334 = sand.u32 %s27, 1
        %s335 = scalar_lea.sflag [#allocation7], %s334
        %s336 = sand.u32 %s86, 1
        %s337 = smul.addr %s336, 64
        %s338 = scalar_lea.vmem [#allocation6], %s337
        %p339 = pneg %p99
        %p340 = pneg %p96
        %s341 = sand.u32 %s27, 1
        %s342 = scalar_lea.sflag [#allocation7], %s341
        %s343 = sand.u32 %s112, 1
        %s344 = smul.addr %s343, 64
        %s345 = scalar_lea.vmem [#allocation8], %s344
        %p346 = pneg %p125
        %p347 = pneg %p122
        %s348 = sand.u32 %s138, 1
        %s349 = scalar_lea.sflag [#allocation10], %s348
        %s350 = sand.u32 %s138, 1
        %s351 = smul.addr %s350, 8
        %s352 = scalar_lea.vmem [#allocation9], %s351
        %p353 = pneg %p151
        %p354 = pneg %p148
        %p355 = pneg %p179
        %p356 = pneg %p176
        %s357 = sand.u32 %s166, 1
        %s358 = scalar_lea.sflag [#allocation5], %s357
        %s359 = sand.u32 %s166, 1
        %s360 = smul.addr %s359, 128
        %s361 = scalar_lea.vmem [#allocation11], %s360
        %s362 = smul.u32 16, %s33
        %s363 = smul.u32 16, %s34
        %s364 = smul.u32 16, %s33
        %p366 = scmp.eq.s32.totalorder %s34, 0
        // Predicated region
        $region53: #{fused_gin_packed.1} parent=35 // pred_check
          %p367 = pneg %p366
        $region54: #{fused_gin_packed.1} parent=35 // pred_check_branch
          %369 = sbr.rel (%p367) target = $region56
        $region55: #{fused_gin_packed.1} parent=35 // pred_region
          %370 = vst [vmem:[#allocation2] sm:$0xff] 0.0
          %371 = vst [vmem:[#allocation2 + $0x8] sm:$0xff] 0.0
          %372 = vst [vmem:[#allocation2 + $0x10] sm:$0xff] 0.0
          %373 = vst [vmem:[#allocation2 + $0x18] sm:$0xff] 0.0
          %374 = vst [vmem:[#allocation2 + $0x20] sm:$0xff] 0.0
          %375 = vst [vmem:[#allocation2 + $0x28] sm:$0xff] 0.0
          %376 = vst [vmem:[#allocation2 + $0x30] sm:$0xff] 0.0
          %377 = vst [vmem:[#allocation2 + $0x38] sm:$0xff] 0.0
          %378 = vst [vmem:[#allocation2 + $0x40] sm:$0xff] 0.0
          %379 = vst [vmem:[#allocation2 + $0x48] sm:$0xff] 0.0
          %380 = vst [vmem:[#allocation2 + $0x50] sm:$0xff] 0.0
          %381 = vst [vmem:[#allocation2 + $0x58] sm:$0xff] 0.0
          %382 = vst [vmem:[#allocation2 + $0x60] sm:$0xff] 0.0
          %383 = vst [vmem:[#allocation2 + $0x68] sm:$0xff] 0.0
          %384 = vst [vmem:[#allocation2 + $0x70] sm:$0xff] 0.0
          %385 = vst [vmem:[#allocation2 + $0x78] sm:$0xff] 0.0
        $region56: #{fused_gin_packed.1} parent=35 // pred_fallthru
          _
        %v386 = vld [vmem:[#allocation2] sm:$0xff]
        %v387 = vld [vmem:[#allocation2 + $0x8] sm:$0xff]
        %v388 = vld [vmem:[#allocation2 + $0x10] sm:$0xff]
        %v389 = vld [vmem:[#allocation2 + $0x18] sm:$0xff]
        %v390 = vld [vmem:[#allocation2 + $0x20] sm:$0xff]
        %v391 = vld [vmem:[#allocation2 + $0x28] sm:$0xff]
        %v392 = vld [vmem:[#allocation2 + $0x30] sm:$0xff]
        %v393 = vld [vmem:[#allocation2 + $0x38] sm:$0xff]
        %v394 = vld [vmem:[#allocation2 + $0x40] sm:$0xff]
        %v395 = vld [vmem:[#allocation2 + $0x48] sm:$0xff]
        %v396 = vld [vmem:[#allocation2 + $0x50] sm:$0xff]
        %v397 = vld [vmem:[#allocation2 + $0x58] sm:$0xff]
        %v398 = vld [vmem:[#allocation2 + $0x60] sm:$0xff]
        %v399 = vld [vmem:[#allocation2 + $0x68] sm:$0xff]
        %v400 = vld [vmem:[#allocation2 + $0x70] sm:$0xff]
        %v401 = vld [vmem:[#allocation2 + $0x78] sm:$0xff]
        %v402 = vld [vmem:[%s295] sm:$0xf]
        %v403 = vld [vmem:[%s295 + $0x4] sm:$0xf]
        %v404 = vld [vmem:[%s295 + $0x8] sm:$0xf]
        %v405 = vld [vmem:[%s295 + $0xc] sm:$0xf]
        %v406 = vld [vmem:[%s295 + $0x10] sm:$0xf]
        %v407 = vld [vmem:[%s295 + $0x14] sm:$0xf]
        %v408 = vld [vmem:[%s295 + $0x18] sm:$0xf]
        %v409 = vld [vmem:[%s295 + $0x1c] sm:$0xf]
        %v410 = vld [vmem:[%s295 + $0x20] sm:$0xf]
        %v411 = vld [vmem:[%s295 + $0x24] sm:$0xf]
        %v412 = vld [vmem:[%s295 + $0x28] sm:$0xf]
        %v413 = vld [vmem:[%s295 + $0x2c] sm:$0xf]
        %v414 = vld [vmem:[%s295 + $0x30] sm:$0xf]
        %v415 = vld [vmem:[%s295 + $0x34] sm:$0xf]
        %v416 = vld [vmem:[%s295 + $0x38] sm:$0xf]
        %v417 = vld [vmem:[%s295 + $0x3c] sm:$0xf]
        %v418 = vld [vmem:[%s304] sm:$0xf]
        %v419 = vld [vmem:[%s304 + $0x4] sm:$0xf]
        %v420 = vld [vmem:[%s304 + $0x8] sm:$0xf]
        %v421 = vld [vmem:[%s304 + $0xc] sm:$0xf]
        %v422 = vld [vmem:[%s304 + $0x10] sm:$0xf]
        %v423 = vld [vmem:[%s304 + $0x14] sm:$0xf]
        %v424 = vld [vmem:[%s304 + $0x18] sm:$0xf]
        %v425 = vld [vmem:[%s304 + $0x1c] sm:$0xf]
        %v426 = vld [vmem:[%s304 + $0x20] sm:$0xf]
        %v427 = vld [vmem:[%s304 + $0x24] sm:$0xf]
        %v428 = vld [vmem:[%s304 + $0x28] sm:$0xf]
        %v429 = vld [vmem:[%s304 + $0x2c] sm:$0xf]
        %v430 = vld [vmem:[%s304 + $0x30] sm:$0xf]
        %v431 = vld [vmem:[%s304 + $0x34] sm:$0xf]
        %v432 = vld [vmem:[%s304 + $0x38] sm:$0xf]
        %v433 = vld [vmem:[%s304 + $0x3c] sm:$0xf]
        %v450 = vunpack.c.l.b16 %v402
        %v451 = vunpack.c.l.b16 %v403
        %v452 = vunpack.c.l.b16 %v404
        %v453 = vunpack.c.l.b16 %v405
        %v454 = vunpack.c.l.b16 %v406
        %v455 = vunpack.c.l.b16 %v407
        %v456 = vunpack.c.l.b16 %v408
        %v457 = vunpack.c.l.b16 %v409
        %v458 = vunpack.c.l.b16 %v410
        %v459 = vunpack.c.l.b16 %v411
        %v460 = vunpack.c.l.b16 %v412
        %v461 = vunpack.c.l.b16 %v413
        %v462 = vunpack.c.l.b16 %v414
        %v463 = vunpack.c.l.b16 %v415
        %v464 = vunpack.c.l.b16 %v416
        %v465 = vunpack.c.l.b16 %v417
        %v466 = vpack.c.b16 %v451, %v450
        %v467 = vpack.c.b16 %v453, %v452
        %v468 = vpack.c.b16 %v455, %v454
        %v469 = vpack.c.b16 %v457, %v456
        %v470 = vpack.c.b16 %v459, %v458
        %v471 = vpack.c.b16 %v461, %v460
        %v472 = vpack.c.b16 %v463, %v462
        %v473 = vpack.c.b16 %v465, %v464
        %v498 = vunpack.c.l.b16 %v418
        %v499 = vunpack.c.l.b16 %v419
        %v500 = vunpack.c.l.b16 %v420
        %v501 = vunpack.c.l.b16 %v421
        %v502 = vunpack.c.l.b16 %v422
        %v503 = vunpack.c.l.b16 %v423
        %v504 = vunpack.c.l.b16 %v424
        %v505 = vunpack.c.l.b16 %v425
        %v506 = vunpack.c.l.b16 %v426
        %v507 = vunpack.c.l.b16 %v427
        %v508 = vunpack.c.l.b16 %v428
        %v509 = vunpack.c.l.b16 %v429
        %v510 = vunpack.c.l.b16 %v430
        %v511 = vunpack.c.l.b16 %v431
        %v512 = vunpack.c.l.b16 %v432
        %v513 = vunpack.c.l.b16 %v433
        %v514 = vpack.c.b16 %v499, %v498
        %v515 = vpack.c.b16 %v501, %v500
        %v516 = vpack.c.b16 %v503, %v502
        %v517 = vpack.c.b16 %v505, %v504
        %v518 = vpack.c.b16 %v507, %v506
        %v519 = vpack.c.b16 %v509, %v508
        %v520 = vpack.c.b16 %v511, %v510
        %v521 = vpack.c.b16 %v513, %v512
        %530 = vmatprep.subr.bf16.mxu0 0
        %531 = vmatpush1.bf16.msra.mxu0 %v514
        %532 = vmatprep.subr.bf16.mxu0 0
        %533 = vmatpush1.bf16.msra.mxu0 %v515
        %534 = vmatprep.subr.bf16.mxu0 0
        %535 = vmatpush1.bf16.msra.mxu0 %v516
        %536 = vmatprep.subr.bf16.mxu0 0
        %537 = vmatpush1.bf16.msra.mxu0 %v517
        %538 = vmatprep.subr.bf16.mxu0 0
        %539 = vmatpush1.bf16.msra.mxu0 %v518
        %540 = vmatprep.subr.bf16.mxu0 0
        %541 = vmatpush1.bf16.msra.mxu0 %v519
        %542 = vmatprep.subr.bf16.mxu0 0
        %543 = vmatpush1.bf16.msra.mxu0 %v520
        %544 = vmatprep.subr.bf16.mxu0 0
        %545 = vmatpush1.bf16.msra.mxu0 %v521
        %546 = vmatprep.subr.bf16.mxu0 0
        %547 = vmatpush1.bf16.msra.mxu0 0
        %548 = vmatprep.subr.bf16.mxu0 0
        %549 = vmatpush1.bf16.msra.mxu0 0
        %550 = vmatprep.subr.bf16.mxu0 0
        %551 = vmatpush1.bf16.msra.mxu0 0
        %552 = vmatprep.subr.bf16.mxu0 0
        %553 = vmatpush1.bf16.msra.mxu0 0
        %554 = vmatprep.subr.bf16.mxu0 0
        %555 = vmatpush1.bf16.msra.mxu0 0
        %556 = vmatprep.subr.bf16.mxu0 0
        %557 = vmatpush1.bf16.msra.mxu0 0
        %558 = vmatprep.subr.bf16.mxu0 0
        %559 = vmatpush1.bf16.msra.mxu0 0
        %560 = vmatprep.subr.bf16.mxu0 0
        %561 = vmatpush1.bf16.msra.mxu0 0
        %562 = vmatprep.mubr.bf16.mxu0 0
        %563 = vmatmul.mubr.bf16.gmra.mrb[0].mxu0 %v466
        %v564 = vpop.f32.mrb[0].mxu0
        %v565 = vadd.f32 0.0, %v564
        %v566 = vpop.f32.mrb[0].mxu0
        %v567 = vpop.f32.mrb[0].mxu0
        %v568 = vadd.f32 0.0, %v567
        %v569 = vpop.f32.mrb[0].mxu0
        %570 = vmatprep.mubr.bf16.mxu0 0
        %571 = vmatmul.mubr.bf16.gmra.mrb[0].mxu0 %v467
        %v572 = vpop.f32.mrb[0].mxu0
        %v573 = vadd.f32 0.0, %v572
        %v574 = vpop.f32.mrb[0].mxu0
        %v575 = vpop.f32.mrb[0].mxu0
        %v576 = vadd.f32 0.0, %v575
        %v577 = vpop.f32.mrb[0].mxu0
        %578 = vmatprep.mubr.bf16.mxu0 0
        %579 = vmatmul.mubr.bf16.gmra.mrb[0].mxu0 %v468
        %v580 = vpop.f32.mrb[0].mxu0
        %v581 = vadd.f32 0.0, %v580
        %v582 = vpop.f32.mrb[0].mxu0
        %v583 = vpop.f32.mrb[0].mxu0
        %v584 = vadd.f32 0.0, %v583
        %v585 = vpop.f32.mrb[0].mxu0
        %586 = vmatprep.mubr.bf16.mxu0 0
        %587 = vmatmul.mubr.bf16.gmra.mrb[0].mxu0 %v469
        %v588 = vpop.f32.mrb[0].mxu0
        %v589 = vadd.f32 0.0, %v588
        %v590 = vpop.f32.mrb[0].mxu0
        %v591 = vpop.f32.mrb[0].mxu0
        %v592 = vadd.f32 0.0, %v591
        %v593 = vpop.f32.mrb[0].mxu0
        %594 = vmatprep.mubr.bf16.mxu0 0
        %595 = vmatmul.mubr.bf16.gmra.mrb[0].mxu0 %v470
        %v596 = vpop.f32.mrb[0].mxu0
        %v597 = vadd.f32 0.0, %v596
        %v598 = vpop.f32.mrb[0].mxu0
        %v599 = vpop.f32.mrb[0].mxu0
        %v600 = vadd.f32 0.0, %v599
        %v601 = vpop.f32.mrb[0].mxu0
        %602 = vmatprep.mubr.bf16.mxu0 0
        %603 = vmatmul.mubr.bf16.gmra.mrb[0].mxu0 %v471
        %v604 = vpop.f32.mrb[0].mxu0
        %v605 = vadd.f32 0.0, %v604
        %v606 = vpop.f32.mrb[0].mxu0
        %v607 = vpop.f32.mrb[0].mxu0
        %v608 = vadd.f32 0.0, %v607
        %v609 = vpop.f32.mrb[0].mxu0
        %610 = vmatprep.mubr.bf16.mxu0 0
        %611 = vmatmul.mubr.bf16.gmra.mrb[0].mxu0 %v472
        %v612 = vpop.f32.mrb[0].mxu0
        %v613 = vadd.f32 0.0, %v612
        %v614 = vpop.f32.mrb[0].mxu0
        %v615 = vpop.f32.mrb[0].mxu0
        %v616 = vadd.f32 0.0, %v615
        %v617 = vpop.f32.mrb[0].mxu0
        %618 = vmatprep.mubr.bf16.mxu0 0
        %619 = vmatmul.mubr.bf16.gmra.mrb[0].mxu0 %v473
        %v620 = vpop.f32.mrb[0].mxu0
        %v621 = vadd.f32 0.0, %v620
        %v622 = vpop.f32.mrb[0].mxu0
        %v623 = vpop.f32.mrb[0].mxu0
        %v624 = vadd.f32 0.0, %v623
        %v625 = vpop.f32.mrb[0].mxu0
        %626 = vdwg.mxu0
        %v627 = vadd.f32 %v386, %v565
        %v628 = vadd.f32 %v387, %v568
        %v629 = vadd.f32 %v388, %v573
        %v630 = vadd.f32 %v389, %v576
        %v631 = vadd.f32 %v390, %v581
        %v632 = vadd.f32 %v391, %v584
        %v633 = vadd.f32 %v392, %v589
        %v634 = vadd.f32 %v393, %v592
        %v635 = vadd.f32 %v394, %v597
        %v636 = vadd.f32 %v395, %v600
        %v637 = vadd.f32 %v396, %v605
        %v638 = vadd.f32 %v397, %v608
        %v639 = vadd.f32 %v398, %v613
        %v640 = vadd.f32 %v399, %v616
        %v641 = vadd.f32 %v400, %v621
        %v642 = vadd.f32 %v401, %v624
        %643 = vst [vmem:[#allocation2] sm:$0xff] %v627
        %644 = vst [vmem:[#allocation2 + $0x8] sm:$0xff] %v628
        %645 = vst [vmem:[#allocation2 + $0x10] sm:$0xff] %v629
        %646 = vst [vmem:[#allocation2 + $0x18] sm:$0xff] %v630
        %647 = vst [vmem:[#allocation2 + $0x20] sm:$0xff] %v631
        %648 = vst [vmem:[#allocation2 + $0x28] sm:$0xff] %v632
        %649 = vst [vmem:[#allocation2 + $0x30] sm:$0xff] %v633
        %650 = vst [vmem:[#allocation2 + $0x38] sm:$0xff] %v634
        %651 = vst [vmem:[#allocation2 + $0x40] sm:$0xff] %v635
        %652 = vst [vmem:[#allocation2 + $0x48] sm:$0xff] %v636
        %653 = vst [vmem:[#allocation2 + $0x50] sm:$0xff] %v637
        %654 = vst [vmem:[#allocation2 + $0x58] sm:$0xff] %v638
        %655 = vst [vmem:[#allocation2 + $0x60] sm:$0xff] %v639
        %656 = vst [vmem:[#allocation2 + $0x68] sm:$0xff] %v640
        %657 = vst [vmem:[#allocation2 + $0x70] sm:$0xff] %v641
        %658 = vst [vmem:[#allocation2 + $0x78] sm:$0xff] %v642
        // Predicated region
        $region57: #{fused_gin_packed.1} parent=35 // pred_check
          %p659 = pneg %p366
        $region58: #{fused_gin_packed.1} parent=35 // pred_check_branch
          %661 = sbr.rel (%p659) target = $region60
        $region59: #{fused_gin_packed.1} parent=35 // pred_region
          %v662 = vld [vmem:[#allocation2] sm:$0xff]
          %v663 = vld [vmem:[#allocation2 + $0x8] sm:$0xff]
          %v664 = vld [vmem:[#allocation2 + $0x10] sm:$0xff]
          %v665 = vld [vmem:[#allocation2 + $0x18] sm:$0xff]
          %v666 = vld [vmem:[#allocation2 + $0x20] sm:$0xff]
          %v667 = vld [vmem:[#allocation2 + $0x28] sm:$0xff]
          %v668 = vld [vmem:[#allocation2 + $0x30] sm:$0xff]
          %v669 = vld [vmem:[#allocation2 + $0x38] sm:$0xff]
          %v670 = vld [vmem:[#allocation2 + $0x40] sm:$0xff]
          %v671 = vld [vmem:[#allocation2 + $0x48] sm:$0xff]
          %v672 = vld [vmem:[#allocation2 + $0x50] sm:$0xff]
          %v673 = vld [vmem:[#allocation2 + $0x58] sm:$0xff]
          %v674 = vld [vmem:[#allocation2 + $0x60] sm:$0xff]
          %v675 = vld [vmem:[#allocation2 + $0x68] sm:$0xff]
          %v676 = vld [vmem:[#allocation2 + $0x70] sm:$0xff]
          %v677 = vld [vmem:[#allocation2 + $0x78] sm:$0xff]
          %v678 = vpack.c.bf16 %v663, %v662
          %v679 = vpack.c.bf16 %v665, %v664
          %v680 = vpack.c.bf16 %v667, %v666
          %v681 = vpack.c.bf16 %v669, %v668
          %v682 = vpack.c.bf16 %v671, %v670
          %v683 = vpack.c.bf16 %v673, %v672
          %v684 = vpack.c.bf16 %v675, %v674
          %v685 = vpack.c.bf16 %v677, %v676
          %v686 = vld [vmem:[%s313] sm:$0xf]
          %v687 = vld [vmem:[%s313 + $0x4] sm:$0xf]
          %v688 = vld [vmem:[%s313 + $0x8] sm:$0xf]
          %v689 = vld [vmem:[%s313 + $0xc] sm:$0xf]
          %v690 = vld [vmem:[%s313 + $0x10] sm:$0xf]
          %v691 = vld [vmem:[%s313 + $0x14] sm:$0xf]
          %v692 = vld [vmem:[%s313 + $0x18] sm:$0xf]
          %v693 = vld [vmem:[%s313 + $0x1c] sm:$0xf]
          %v694 = vld [vmem:[%s313 + $0x20] sm:$0xf]
          %v695 = vld [vmem:[%s313 + $0x24] sm:$0xf]
          %v696 = vld [vmem:[%s313 + $0x28] sm:$0xf]
          %v697 = vld [vmem:[%s313 + $0x2c] sm:$0xf]
          %v698 = vld [vmem:[%s313 + $0x30] sm:$0xf]
          %v699 = vld [vmem:[%s313 + $0x34] sm:$0xf]
          %v700 = vld [vmem:[%s313 + $0x38] sm:$0xf]
          %v701 = vld [vmem:[%s313 + $0x3c] sm:$0xf]
          %v702 = vld [vmem:[%s322] sm:$0x1]
          %v703 = vlaneseq
          %v704 = vshrl.u32 %v703, 7
          %v705 = vsub.s32 0, %v704
          %v706 = vrot.slane %v702, %v705
          %v723 = vunpack.c.l.b16 %v686
          %v724 = vunpack.c.l.b16 %v687
          %v725 = vunpack.c.l.b16 %v688
          %v726 = vunpack.c.l.b16 %v689
          %v727 = vunpack.c.l.b16 %v690
          %v728 = vunpack.c.l.b16 %v691
          %v729 = vunpack.c.l.b16 %v692
          %v730 = vunpack.c.l.b16 %v693
          %v731 = vunpack.c.l.b16 %v694
          %v732 = vunpack.c.l.b16 %v695
          %v733 = vunpack.c.l.b16 %v696
          %v734 = vunpack.c.l.b16 %v697
          %v735 = vunpack.c.l.b16 %v698
          %v736 = vunpack.c.l.b16 %v699
          %v737 = vunpack.c.l.b16 %v700
          %v738 = vunpack.c.l.b16 %v701
          %v739 = vpack.c.b16 %v724, %v723
          %v740 = vpack.c.b16 %v726, %v725
          %v741 = vpack.c.b16 %v728, %v727
          %v742 = vpack.c.b16 %v730, %v729
          %v743 = vpack.c.b16 %v732, %v731
          %v744 = vpack.c.b16 %v734, %v733
          %v745 = vpack.c.b16 %v736, %v735
          %v746 = vpack.c.b16 %v738, %v737
          %755 = vmatprep.subr.bf16.mxu0 0
          %756 = vmatpush1.bf16.msra.mxu0 %v739
          %757 = vmatprep.subr.bf16.mxu0 0
          %758 = vmatpush1.bf16.msra.mxu0 %v740
          %759 = vmatprep.subr.bf16.mxu0 0
          %760 = vmatpush1.bf16.msra.mxu0 %v741
          %761 = vmatprep.subr.bf16.mxu0 0
          %762 = vmatpush1.bf16.msra.mxu0 %v742
          %763 = vmatprep.subr.bf16.mxu0 0
          %764 = vmatpush1.bf16.msra.mxu0 %v743
          %765 = vmatprep.subr.bf16.mxu0 0
          %766 = vmatpush1.bf16.msra.mxu0 %v744
          %767 = vmatprep.subr.bf16.mxu0 0
          %768 = vmatpush1.bf16.msra.mxu0 %v745
          %769 = vmatprep.subr.bf16.mxu0 0
          %770 = vmatpush1.bf16.msra.mxu0 %v746
          %771 = vmatprep.subr.bf16.mxu0 0
          %772 = vmatpush1.bf16.msra.mxu0 0
          %773 = vmatprep.subr.bf16.mxu0 0
          %774 = vmatpush1.bf16.msra.mxu0 0
          %775 = vmatprep.subr.bf16.mxu0 0
          %776 = vmatpush1.bf16.msra.mxu0 0
          %777 = vmatprep.subr.bf16.mxu0 0
          %778 = vmatpush1.bf16.msra.mxu0 0
          %779 = vmatprep.subr.bf16.mxu0 0
          %780 = vmatpush1.bf16.msra.mxu0 0
          %781 = vmatprep.subr.bf16.mxu0 0
          %782 = vmatpush1.bf16.msra.mxu0 0
          %783 = vmatprep.subr.bf16.mxu0 0
          %784 = vmatpush1.bf16.msra.mxu0 0
          %785 = vmatprep.subr.bf16.mxu0 0
          %786 = vmatpush1.bf16.msra.mxu0 0
          %787 = vmatprep.mubr.bf16.mxu0 0
          %788 = vmatmul.mubr.bf16.gmra.mrb[0].mxu0 %v678
          %v789 = vpop.f32.mrb[0].mxu0
          %v790 = vadd.f32 %v706, %v789
          %v791 = vpop.f32.mrb[0].mxu0
          %v792 = vpop.f32.mrb[0].mxu0
          %v793 = vadd.f32 %v706, %v792
          %v794 = vpop.f32.mrb[0].mxu0
          %795 = vmatprep.mubr.bf16.mxu0 0
          %796 = vmatmul.mubr.bf16.gmra.mrb[0].mxu0 %v679
          %v797 = vpop.f32.mrb[0].mxu0
          %v798 = vadd.f32 %v706, %v797
          %v799 = vpop.f32.mrb[0].mxu0
          %v800 = vpop.f32.mrb[0].mxu0
          %v801 = vadd.f32 %v706, %v800
          %v802 = vpop.f32.mrb[0].mxu0
          %803 = vmatprep.mubr.bf16.mxu0 0
          %804 = vmatmul.mubr.bf16.gmra.mrb[0].mxu0 %v680
          %v805 = vpop.f32.mrb[0].mxu0
          %v806 = vadd.f32 %v706, %v805
          %v807 = vpop.f32.mrb[0].mxu0
          %v808 = vpop.f32.mrb[0].mxu0
          %v809 = vadd.f32 %v706, %v808
          %v810 = vpop.f32.mrb[0].mxu0
          %811 = vmatprep.mubr.bf16.mxu0 0
          %812 = vmatmul.mubr.bf16.gmra.mrb[0].mxu0 %v681
          %v813 = vpop.f32.mrb[0].mxu0
          %v814 = vadd.f32 %v706, %v813
          %v815 = vpop.f32.mrb[0].mxu0
          %v816 = vpop.f32.mrb[0].mxu0
          %v817 = vadd.f32 %v706, %v816
          %v818 = vpop.f32.mrb[0].mxu0
          %819 = vmatprep.mubr.bf16.mxu0 0
          %820 = vmatmul.mubr.bf16.gmra.mrb[0].mxu0 %v682
          %v821 = vpop.f32.mrb[0].mxu0
          %v822 = vadd.f32 %v706, %v821
          %v823 = vpop.f32.mrb[0].mxu0
          %v824 = vpop.f32.mrb[0].mxu0
          %v825 = vadd.f32 %v706, %v824
          %v826 = vpop.f32.mrb[0].mxu0
          %827 = vmatprep.mubr.bf16.mxu0 0
          %828 = vmatmul.mubr.bf16.gmra.mrb[0].mxu0 %v683
          %v829 = vpop.f32.mrb[0].mxu0
          %v830 = vadd.f32 %v706, %v829
          %v831 = vpop.f32.mrb[0].mxu0
          %v832 = vpop.f32.mrb[0].mxu0
          %v833 = vadd.f32 %v706, %v832
          %v834 = vpop.f32.mrb[0].mxu0
          %835 = vmatprep.mubr.bf16.mxu0 0
          %836 = vmatmul.mubr.bf16.gmra.mrb[0].mxu0 %v684
          %v837 = vpop.f32.mrb[0].mxu0
          %v838 = vadd.f32 %v706, %v837
          %v839 = vpop.f32.mrb[0].mxu0
          %v840 = vpop.f32.mrb[0].mxu0
          %v841 = vadd.f32 %v706, %v840
          %v842 = vpop.f32.mrb[0].mxu0
          %843 = vmatprep.mubr.bf16.mxu0 0
          %844 = vmatmul.mubr.bf16.gmra.mrb[0].mxu0 %v685
          %v845 = vpop.f32.mrb[0].mxu0
          %v846 = vadd.f32 %v706, %v845
          %v847 = vpop.f32.mrb[0].mxu0
          %v848 = vpop.f32.mrb[0].mxu0
          %v849 = vadd.f32 %v706, %v848
          %v850 = vpop.f32.mrb[0].mxu0
          %851 = vdwg.mxu0
          %v852 = vmax.f32 %v790, 0.0
          %v853 = vmax.f32 %v793, 0.0
          %v854 = vmax.f32 %v798, 0.0
          %v855 = vmax.f32 %v801, 0.0
          %v856 = vmax.f32 %v806, 0.0
          %v857 = vmax.f32 %v809, 0.0
          %v858 = vmax.f32 %v814, 0.0
          %v859 = vmax.f32 %v817, 0.0
          %v860 = vmax.f32 %v822, 0.0
          %v861 = vmax.f32 %v825, 0.0
          %v862 = vmax.f32 %v830, 0.0
          %v863 = vmax.f32 %v833, 0.0
          %v864 = vmax.f32 %v838, 0.0
          %v865 = vmax.f32 %v841, 0.0
          %v866 = vmax.f32 %v846, 0.0
          %v867 = vmax.f32 %v849, 0.0
          %868 = vst [vmem:[%s361] sm:$0xff] %v852
          %869 = vst [vmem:[%s361 + $0x8] sm:$0xff] %v853
          %870 = vst [vmem:[%s361 + $0x10] sm:$0xff] %v854
          %871 = vst [vmem:[%s361 + $0x18] sm:$0xff] %v855
          %872 = vst [vmem:[%s361 + $0x20] sm:$0xff] %v856
          %873 = vst [vmem:[%s361 + $0x28] sm:$0xff] %v857
          %874 = vst [vmem:[%s361 + $0x30] sm:$0xff] %v858
          %875 = vst [vmem:[%s361 + $0x38] sm:$0xff] %v859
          %876 = vst [vmem:[%s361 + $0x40] sm:$0xff] %v860
          %877 = vst [vmem:[%s361 + $0x48] sm:$0xff] %v861
          %878 = vst [vmem:[%s361 + $0x50] sm:$0xff] %v862
          %879 = vst [vmem:[%s361 + $0x58] sm:$0xff] %v863
          %880 = vst [vmem:[%s361 + $0x60] sm:$0xff] %v864
          %881 = vst [vmem:[%s361 + $0x68] sm:$0xff] %v865
          %882 = vst [vmem:[%s361 + $0x70] sm:$0xff] %v866
          %883 = vst [vmem:[%s361 + $0x78] sm:$0xff] %v867
        $region60: #{fused_gin_packed.1} parent=35 // pred_fallthru
          _
        %s884 = sand.u32 %s166, 1
        %s885 = scalar_lea.sflag [#allocation5], %s884
        %s886 = sand.u32 %s166, 1
        %s887 = smul.addr %s886, 128
        %s888 = scalar_lea.vmem [#allocation11], %s887
        // Predicated region
        $region61: #{fused_gin_packed.1} parent=35 // pred_check
          %p889 = pneg %p176
        $region62: #{fused_gin_packed.1} parent=35 // pred_check_branch
          %891 = sbr.rel (%p889) target = $region64
        $region63: #{fused_gin_packed.1} parent=35 // pred_region
          %s892 = smul.u32 16, %s33
          %s894 = ssub.s32 2048, 2048
          %895 = vsyncadd %s885, %s894
          %s896 = smul.addr %s32, 16
          %s897 = sadd.s32 %s892, %s896
          %s898 = smul.addr %s897, 128
          %s899 = scalar_lea.hbm %s4, %s898
          %s900 = sshll.u32 %s888, 4
          %s901 = int_to_ptr.vmem [resolvable:$true] %s900
          %906 = dma.vmem_to_hbm [thread:$0]  %s901, 2048, %s899, %s885, 128, 128, 8
        $region64: #{fused_gin_packed.1} parent=35 // pred_fallthru
          _
      $region36: #{fused_gin_packed.1} parent=5 // pred_fallthru
        _
      %p907 = scmp.le.s32.totalorder 2, %s22
      // Predicated region
      $region65: #{fused_gin_packed.1} parent=5 // pred_check
        %p908 = pneg %p907
      $region66: #{fused_gin_packed.1} parent=5 // pred_check_branch
        %910 = sbr.rel (%p908) target = $region68
      $region67: #{fused_gin_packed.1} parent=5 // pred_region
        %s911 = ssub.s32 %s22, 2
        // Predicated region
        $region69: #{fused_gin_packed.1} parent=67 // pred_check
          %p912 = pneg %p182
        $region70: #{fused_gin_packed.1} parent=67 // pred_check_branch
          %914 = sbr.rel (%p912) target = $region72
        $region71: #{fused_gin_packed.1} parent=67 // pred_region
          %s915 = sand.u32 %s167, 1
          %s916 = scalar_lea.sflag [#allocation5], %s915
          %s917 = sand.u32 %s167, 1
          %s918 = smul.addr %s917, 128
          %s919 = scalar_lea.vmem [#allocation11], %s918
          %920 = dma.done %s916, 2048
        $region72: #{fused_gin_packed.1} parent=67 // pred_fallthru
          _
      $region68: #{fused_gin_packed.1} parent=5 // pred_fallthru
        _
    $region6: #{fused_gin_packed.1} parent=1 // loop_footer
      %s26 = sadd.s32 1, %s22
    $region7: #{fused_gin_packed.1} parent=1 // loop_footer_branch
      %21 = sbr.rel target = $region3
    $region8: #{fused_gin_packed.1} parent=1 // loop_exit
      _
    %921 = vsyncpa [#allocation4], 1
    %s922 = scalar_lea.sflag [#allocation4], 1
    %923 = vsyncpa %s922, 1
    %924 = vsyncpa [#allocation7], 1
    %s925 = scalar_lea.sflag [#allocation7], 1
    %926 = vsyncpa %s925, 1
    %927 = vsyncpa [#allocation10], 1
    %s928 = scalar_lea.sflag [#allocation10], 1
    %929 = vsyncpa %s928, 1
    %930 = vsyncpa [#allocation5], 1
    %s931 = scalar_lea.sflag [#allocation5], 1
    %932 = vsyncpa %s931, 1

</llo_original>
